<compile_context>
chip_gen: v6e
topology: v6e:2x2x1
jax: 0.10.0
libtpu: 0.0.40
codegen_flags: <defaults>
</compile_context>

<pallas_src>
import math
import functools

import jax
import jax.numpy as jnp
from jax import lax
from jax.experimental import pallas as pl
from jax.experimental.pallas import tpu as pltpu


# Large finite negative used for masking / running-max init (NaN-safe).
_MASK_VALUE = -0.7 * float(jnp.finfo(jnp.float32).max)
# Explicit scoped-VMEM ceiling: > default (16/32 MiB) but leaves headroom on
# v7x's 64 MiB-per-TensorCore physical VMEM.
_VMEM_LIMIT = 48 * 1024 * 1024


# ------------------------------ tile helpers -------------------------------

def _pick_tile(dim, target, align):
    """Largest multiple of `align` <= target that divides dim, else dim."""
    if dim <= target:
        return dim
    t = (target // align) * align
    while t >= align:
        if dim % t == 0:
            return t
        t -= align
    return dim


# ------------------ fused QKV projection (+ RoPE epilogue) ------------------

def _qkv_proj_kernel(x_ref, w_ref, cos_ref, sin_ref, o_ref, acc_ref,
                     *, num_rope_heads, d_half):
    h = pl.program_id(2)
    k = pl.program_id(3)
    nk = pl.num_programs(3)

    @pl.when(k == 0)
    def _():
        acc_ref[...] = jnp.zeros_like(acc_ref)

    acc_ref[...] += jnp.dot(x_ref[...][0], w_ref[...][0],
                            preferred_element_type=jnp.float32)

    last = k == nk - 1

    # Q / K heads: apply rotary embedding once, here, so the attention kernel
    # consumes pre-rotated bf16 Q/K and streams no cos/sin tables at all.
    @pl.when(jnp.logical_and(last, h < num_rope_heads))
    def _():
        # bf16-round first to match the reference (rope applied to bf16 proj).
        val = acc_ref[...].astype(jnp.bfloat16).astype(jnp.float32)
        rot = (val * cos_ref[...][0]
               + pltpu.roll(val, d_half, axis=1) * sin_ref[...][0])
        o_ref[0, 0] = rot.astype(o_ref.dtype)

    # V heads: no rotary.
    @pl.when(jnp.logical_and(last, h >= num_rope_heads))
    def _():
        o_ref[0, 0] = acc_ref[...].astype(o_ref.dtype)


def qkv_projection(x_bf, w_qkv, cos, sin_signed, num_rope_heads,
                   *, block_s=None, block_k=None):
    """x_bf: [B,S,hidden] bf16; w_qkv: [Htot,hidden,D] bf16;
       cos/sin_signed: [B,S,D] f32 -> [Htot,B,S,D] bf16 (head-major,
       Q/K heads pre-rotated)."""
    B, S, hidden = x_bf.shape
    Htot, _, D = w_qkv.shape
    ts = block_s or _pick_tile(S, 512, 8)
    tk = block_k or _pick_tile(hidden, 512, 128)
    assert S % ts == 0 and hidden % tk == 0 and D % 2 == 0

    # NOTE: per-step matmul N = head_dim; pairing heads on the lane axis would
    # fill the 256-wide MXU on v6e/v7x but complicates the per-head rope roll.
    kernel = functools.partial(_qkv_proj_kernel,
                               num_rope_heads=num_rope_heads, d_half=D // 2)

    return pl.pallas_call(
        kernel,
        out_shape=jax.ShapeDtypeStruct((Htot, B, S, D), jnp.bfloat16),
        grid=(B, S // ts, Htot, hidden // tk),
        in_specs=[
            pl.BlockSpec((1, ts, tk), lambda b, i, h, k: (b, i, k)),
            pl.BlockSpec((1, tk, D), lambda b, i, h, k: (h, k, 0)),
            # rope tables: block index depends only on (b, i) -> DMA'd once
            # per (b, s-tile), reused across all heads and k steps.
            pl.BlockSpec((1, ts, D), lambda b, i, h, k: (b, i, 0)),
            pl.BlockSpec((1, ts, D), lambda b, i, h, k: (b, i, 0)),
        ],
        out_specs=pl.BlockSpec((1, 1, ts, D), lambda b, i, h, k: (h, b, i, 0)),
        scratch_shapes=[pltpu.VMEM((ts, D), jnp.float32)],
        compiler_params=pltpu.CompilerParams(
            dimension_semantics=("parallel", "parallel", "parallel", "arbitrary"),
            vmem_limit_bytes=_VMEM_LIMIT),
    )(x_bf, w_qkv, cos, sin_signed)


# ------------------------------ O projection --------------------------------

def _o_proj_kernel(a_ref, w_ref, o_ref, acc_ref):
    h = pl.program_id(3)

    @pl.when(h == 0)
    def _():
        acc_ref[...] = jnp.zeros_like(acc_ref)

    acc_ref[...] += jnp.dot(a_ref[...][0, 0], w_ref[...][0],
                            preferred_element_type=jnp.float32)

    @pl.when(h == pl.num_programs(3) - 1)
    def _():
        o_ref[0] = acc_ref[...].astype(o_ref.dtype)


def o_projection(attn, w_o, out_dtype, *, block_s=None, block_n=None):
    """attn: [H,B,S,D] bf16; w_o: [H,D,hidden] bf16 -> [B,S,hidden]."""
    H, B, S, D = attn.shape
    _, _, hidden = w_o.shape
    ts = block_s or _pick_tile(S, 512, 8)
    tn = block_n or _pick_tile(hidden, 512, 128)
    assert S % ts == 0 and hidden % tn == 0

    return pl.pallas_call(
        _o_proj_kernel,
        out_shape=jax.ShapeDtypeStruct((B, S, hidden), out_dtype),
        grid=(B, S // ts, hidden // tn, H),
        in_specs=[
            pl.BlockSpec((1, 1, ts, D), lambda b, i, n, h: (h, b, i, 0)),
            pl.BlockSpec((1, D, tn), lambda b, i, n, h: (h, 0, n)),
        ],
        out_specs=pl.BlockSpec((1, ts, tn), lambda b, i, n, h: (b, i, n)),
        scratch_shapes=[pltpu.VMEM((ts, tn), jnp.float32)],
        compiler_params=pltpu.CompilerParams(
            dimension_semantics=("parallel", "parallel", "parallel", "arbitrary"),
            vmem_limit_bytes=_VMEM_LIMIT),
    )(attn, w_o)


# -------------------- flash attention (online softmax) ----------------------

def _attn_kernel(q_ref, k_ref, v_ref, o_ref, m_sc, l_sc, acc_sc,
                 *, scale, block_q, block_kv, groups):
    qi = pl.program_id(2)
    ki = pl.program_id(3)
    nk = pl.num_programs(3)
    G, tq, tk = groups, block_q, block_kv

    @pl.when(ki == 0)
    def _():
        m_sc[...] = jnp.full_like(m_sc, _MASK_VALUE)
        l_sc[...] = jnp.zeros_like(l_sc)
        acc_sc[...] = jnp.zeros_like(acc_sc)

    def update(masked):
        # Q/K are already rotated bf16 (rope folded into the QKV projection).
        q = q_ref[...].reshape(G * tq, -1)          # (G*tq, D) bf16
        k = k_ref[...][0, 0]                        # (tk, D)   bf16
        v = v_ref[...][0, 0]                        # (tk, D)   bf16

        s = lax.dot_general(q, k, (((1,), (1,)), ((), ())),
                            preferred_element_type=jnp.float32) * scale
        if masked:
            # Only built on diagonal-crossing tiles; 2-D iotas (no 3-D reshape).
            col = lax.broadcasted_iota(jnp.int32, (G * tq, tk), 1)
            row = lax.broadcasted_iota(jnp.int32, (G * tq, tk), 0) % tq
            s = jnp.where(col - row <= qi * tq - ki * tk, s, _MASK_VALUE)

        m_prev = m_sc[...]
        m_new = jnp.maximum(m_prev, jnp.max(s, axis=-1, keepdims=True))
        alpha = jnp.exp(m_prev - m_new)
        p = jnp.exp(s - m_new)
        l_sc[...] = alpha * l_sc[...] + jnp.sum(p, axis=-1, keepdims=True)
        acc_sc[...] = alpha * acc_sc[...] + jnp.dot(
            p.astype(jnp.bfloat16), v, preferred_element_type=jnp.float32)
        m_sc[...] = m_new

    q_last_row = qi * tq + tq - 1
    kv_first = ki * tk
    kv_last = kv_first + tk - 1
    crosses_diag = kv_last > qi * tq          # some entries need masking
    contributes = kv_first <= q_last_row      # some entries are visible

    @pl.when(jnp.logical_and(contributes, crosses_diag))
    def _():
        update(masked=True)

    @pl.when(jnp.logical_not(crosses_diag))   # fully-visible tile: no mask work
    def _():
        update(masked=False)

    @pl.when(ki == nk - 1)
    def _():
        out = acc_sc[...] * pl.reciprocal(l_sc[...], approx=True)
        o_ref[...] = out.reshape(G, 1, tq, -1).astype(o_ref.dtype)


def flash_attention(qkv, *, num_heads, num_kv_heads, scale,
                    block_q=None, block_kv=None):
    """qkv: [Htot,B,S,D] bf16 (Q heads, K heads, V heads along axis 0,
       Q/K pre-rotated) -> [H,B,S,D] bf16."""
    Htot, B, S, D = qkv.shape
    H, KVH = num_heads, num_kv_heads
    G = H // KVH
    # Defaults keep G*tq >= 256 and tk >= 256 where S allows (v6e/v7x MXU).
    tq = block_q or _pick_tile(S, max(128, 256 // G), 8)
    tk = block_kv or _pick_tile(S, 256, 8)
    assert S % tq == 0 and S % tk == 0

    def kv_block(qi, ki):
        # Clamp causally-skipped kv tiles to the last useful block: the block
        # index doesn't change, so the pipeline elides their K/V DMAs.
        return jnp.minimum(ki, (qi * tq + tq - 1) // tk)

    kernel = functools.partial(_attn_kernel, scale=scale, block_q=tq,
                               block_kv=tk, groups=G)

    return pl.pallas_call(
        kernel,
        out_shape=jax.ShapeDtypeStruct((H, B, S, D), qkv.dtype),
        grid=(B, KVH, S // tq, S // tk),
        in_specs=[
            # Q: all G heads of this kv group at once (GQA K/V reuse).
            pl.BlockSpec((G, 1, tq, D),
                         lambda b, kvh, qi, ki: (kvh, b, qi, 0)),
            pl.BlockSpec((1, 1, tk, D),
                         lambda b, kvh, qi, ki: (H + kvh, b, kv_block(qi, ki), 0)),
            pl.BlockSpec((1, 1, tk, D),
                         lambda b, kvh, qi, ki: (H + KVH + kvh, b,
                                                 kv_block(qi, ki), 0)),
        ],
        out_specs=pl.BlockSpec((G, 1, tq, D),
                               lambda b, kvh, qi, ki: (kvh, b, qi, 0)),
        scratch_shapes=[
            pltpu.VMEM((G * tq, 1), jnp.float32),   # running max
            pltpu.VMEM((G * tq, 1), jnp.float32),   # running denom
            pltpu.VMEM((G * tq, D), jnp.float32),   # output accumulator
        ],
        compiler_params=pltpu.CompilerParams(
            dimension_semantics=("parallel", "parallel", "parallel", "arbitrary"),
            vmem_limit_bytes=_VMEM_LIMIT),
    )(qkv, qkv, qkv)


# ------------------------------ Rotary (glue) -------------------------------

def rotary_tables(position_ids, head_dim, base):
    """GemmaRotaryEmbedding: inv_freq over even indices, emb = cat(freqs, freqs)."""
    inv_freq = 1.0 / (
        base ** (jnp.arange(0, head_dim, 2, dtype=jnp.float32) / head_dim))
    freqs = position_ids[..., None].astype(jnp.float32) * inv_freq[None, None, :]
    emb = jnp.concatenate([freqs, freqs], axis=-1)   # [B, S, D]
    return jnp.cos(emb), jnp.sin(emb)


# --------------------------- Module-level wrapper ----------------------------

class GemmaFlashAttention2Pallas:
    def __init__(self, hidden_size, num_heads, head_dim, num_kv_heads,
                 rope_theta, key, *, attn_block_q=None, attn_block_kv=None,
                 proj_block_s=None, proj_block_k=None, proj_block_n=None):
        self.hidden_size = hidden_size
        self.num_heads = num_heads
        self.head_dim = head_dim
        self.num_kv_heads = num_kv_heads
        self.num_kv_groups = num_heads // num_kv_heads
        self.rope_theta = rope_theta
        self.scaling = 1.0 / math.sqrt(head_dim)
        self.attn_block_q = attn_block_q
        self.attn_block_kv = attn_block_kv
        self.proj_block_s = proj_block_s
        self.proj_block_k = proj_block_k
        self.proj_block_n = proj_block_n

        k0, k1, k2, k3 = jax.random.split(key, 4)
        bound = 1.0 / math.sqrt(hidden_size)
        o_bound = 1.0 / math.sqrt(num_heads * head_dim)
        w_q = jax.random.uniform(k0, (hidden_size, num_heads * head_dim),
                                 jnp.float32, -bound, bound)
        w_k = jax.random.uniform(k1, (hidden_size, num_kv_heads * head_dim),
                                 jnp.float32, -bound, bound)
        w_v = jax.random.uniform(k2, (hidden_size, num_kv_heads * head_dim),
                                 jnp.float32, -bound, bound)
        w_o = jax.random.uniform(k3, (num_heads * head_dim, hidden_size),
                                 jnp.float32, -o_bound, o_bound)

        def to_heads(w, n):   # [hidden, n*D] -> [n, hidden, D]
            return w.reshape(hidden_size, n, head_dim).transpose(1, 0, 2)

        # Fused, head-major, pre-transposed weights (bf16 MXU operands).
        self.w_qkv = jnp.concatenate(
            [to_heads(w_q, num_heads),
             to_heads(w_k, num_kv_heads),
             to_heads(w_v, num_kv_heads)], axis=0).astype(jnp.bfloat16)
        self.w_o = w_o.reshape(num_heads, head_dim, hidden_size).astype(jnp.bfloat16)

        # rotate_half(x) == roll(x, D/2, lane) * sign; fold sign into sin.
        self._rope_sign = jnp.concatenate(
            [-jnp.ones(head_dim // 2, jnp.float32),
             jnp.ones(head_dim // 2, jnp.float32)])

    def __call__(self, hidden_states, position_ids=None):
        B, S, _ = hidden_states.shape
        if position_ids is None:
            position_ids = jnp.broadcast_to(
                jnp.arange(S, dtype=jnp.int32)[None, :], (B, S))

        x_bf = hidden_states.astype(jnp.bfloat16)
        cos, sin = rotary_tables(position_ids, self.head_dim, self.rope_theta)
        sin_signed = sin * self._rope_sign

        # [Htot, B, S, D], Q/K heads already rotated.
        qkv = qkv_projection(x_bf, self.w_qkv, cos, sin_signed,
                             self.num_heads + self.num_kv_heads,
                             block_s=self.proj_block_s,
                             block_k=self.proj_block_k)

        attn = flash_attention(qkv,
                               num_heads=self.num_heads,
                               num_kv_heads=self.num_kv_heads,
                               scale=self.scaling,
                               block_q=self.attn_block_q,
                               block_kv=self.attn_block_kv)    # [H,B,S,D]

        return o_projection(attn, self.w_o, hidden_states.dtype,
                            block_s=self.proj_block_s,
                            block_n=self.proj_block_n)         # [B,S,hidden]


# ------------------------------ Reference (JAX) ------------------------------

def reference_forward(mod, hidden_states, position_ids=None):
    B, S, _ = hidden_states.shape
    H, KVH, D = mod.num_heads, mod.num_kv_heads, mod.head_dim
    G = H // KVH
    if position_ids is None:
        position_ids = jnp.broadcast_to(
            jnp.arange(S, dtype=jnp.int32)[None, :], (B, S))

    x = hidden_states.astype(jnp.bfloat16)
    qkv = jnp.einsum("bsk,hkd->hbsd", x, mod.w_qkv,
                     preferred_element_type=jnp.float32).astype(jnp.bfloat16)
    q, k, v = qkv[:H], qkv[H:H + KVH], qkv[H + KVH:]

    cos, sin = rotary_tables(position_ids, D, mod.rope_theta)

    def rope(t):
        t32 = t.astype(jnp.float32)
        rot = jnp.concatenate([-t32[..., D // 2:], t32[..., :D // 2]], axis=-1)
        return (t32 * cos[None] + rot * sin[None]).astype(jnp.bfloat16)

    q, k = rope(q), rope(k)
    k = jnp.repeat(k, G, axis=0)
    v = jnp.repeat(v, G, axis=0)

    s = jnp.einsum("hbqd,hbkd->hbqk", q, k,
                   preferred_element_type=jnp.float32) * mod.scaling
    mask = jnp.tril(jnp.ones((S, S), dtype=bool))
    s = jnp.where(mask[None, None], s, -jnp.inf)
    p = jax.nn.softmax(s, axis=-1).astype(jnp.bfloat16)
    a = jnp.einsum("hbqk,hbkd->hbqd", p, v,
                   preferred_element_type=jnp.float32).astype(jnp.bfloat16)
    out = jnp.einsum("hbsd,hdn->bsn", a, mod.w_o,
                     preferred_element_type=jnp.float32)
    return out.astype(hidden_states.dtype)


# ----------------------------------- Main ------------------------------------

if __name__ == "__main__":
    B, S = 2, 128
    hidden_size = 256
    num_heads = 4
    head_dim = 128
    num_kv_heads = 2
    rope_theta = 10000.0

    root = jax.random.PRNGKey(0)
    k_w, k_x = jax.random.split(root)

    # Small tiles so the test exercises kv tiling, causal diag/full/skip paths,
    # DMA clamping, GQA grouping and reduction accumulators
    # (production defaults auto-pick 256/512-wide tiles).
    mod = GemmaFlashAttention2Pallas(
        hidden_size, num_heads, head_dim, num_kv_heads, rope_theta, k_w,
        attn_block_q=64, attn_block_kv=64,
        proj_block_s=64, proj_block_k=128, proj_block_n=128)

    hidden_states = jax.random.normal(k_x, (B, S, hidden_size), jnp.float32)

    out = jax.block_until_ready(mod(hidden_states))
    ref = jax.block_until_ready(reference_forward(mod, hidden_states))

    assert out.shape == (B, S, hidden_size)
    assert out.dtype == hidden_states.dtype
    max_err = float(jnp.max(jnp.abs(out - ref)))
    assert jnp.allclose(out, ref, atol=2e-2, rtol=2e-2), (
        f"mismatch vs reference, max abs err {max_err}")

    print("KERNEL_OK")
</pallas_src>

<mosaic_0001>
module attributes {stable_mosaic.version = 11 : i64} {
  func.func @_qkv_proj_kernel(%arg0: i32, %arg1: i32, %arg2: i32, %arg3: i32, %arg4: memref<1x64x128xbf16, #tpu.memory_space<vmem>>, %arg5: memref<1x128x128xbf16, #tpu.memory_space<vmem>>, %arg6: memref<1x64x128xf32, #tpu.memory_space<vmem>>, %arg7: memref<1x64x128xf32, #tpu.memory_space<vmem>>, %arg8: memref<1x1x64x128xbf16, #tpu.memory_space<vmem>>, %arg9: memref<64x128xf32, #tpu.memory_space<vmem>>) attributes {dimension_semantics = [#tpu.dimension_semantics<parallel>, #tpu.dimension_semantics<parallel>, #tpu.dimension_semantics<parallel>, #tpu.dimension_semantics<arbitrary>], iteration_bounds = array<i64: 2, 2, 8, 2>, scalar_prefetch = 0 : i64, scratch_operands = 1 : i64, tpu.core_type = #tpu.core_type<tc>, window_params = [{transform_indices = @transform_0, window_bounds = array<i64: 1, 64, 128>}, {transform_indices = @transform_1, window_bounds = array<i64: 1, 128, 128>}, {transform_indices = @transform_2, window_bounds = array<i64: 1, 64, 128>}, {transform_indices = @transform_3, window_bounds = array<i64: 1, 64, 128>}, {transform_indices = @transform_4, window_bounds = array<i64: 1, 1, 64, 128>}]} {
    %c0_i32 = arith.constant 0 : i32
    %0 = arith.cmpi eq, %arg3, %c0_i32 : i32
    %1 = arith.extui %0 : i1 to i32
    %c0_i32_0 = arith.constant 0 : i32
    %2 = arith.cmpi ne, %1, %c0_i32_0 : i32
    scf.if %2 {
      %cst_13 = arith.constant 0.000000e+00 : f32
      %20 = vector.broadcast %cst_13 : f32 to vector<64x128xf32>
      %c0_14 = arith.constant 0 : index
      %c0_15 = arith.constant 0 : index
      %21 = vector.load %arg9[%c0_14, %c0_15] : memref<64x128xf32, #tpu.memory_space<vmem>>, vector<64x128xf32>
      tpu.vector_store %arg9[%c0_14, %c0_15], %20 {strides = array<i32>} : memref<64x128xf32, #tpu.memory_space<vmem>>, vector<64x128xf32>,
    } else {
    }
    %c0 = arith.constant 0 : index
    %c0_1 = arith.constant 0 : index
    %3 = vector.load %arg9[%c0, %c0_1] : memref<64x128xf32, #tpu.memory_space<vmem>>, vector<64x128xf32>
    %c0_2 = arith.constant 0 : index
    %c0_3 = arith.constant 0 : index
    %c0_4 = arith.constant 0 : index
    %4 = vector.load %arg4[%c0_2, %c0_3, %c0_4] : memref<1x64x128xbf16, #tpu.memory_space<vmem>>, vector<1x64x128xbf16>
    %5 = vector.shape_cast %4 : vector<1x64x128xbf16> to vector<64x128xbf16>
    %c0_5 = arith.constant 0 : index
    %c0_6 = arith.constant 0 : index
    %c0_7 = arith.constant 0 : index
    %6 = vector.load %arg5[%c0_5, %c0_6, %c0_7] : memref<1x128x128xbf16, #tpu.memory_space<vmem>>, vector<1x128x128xbf16>
    %7 = vector.shape_cast %6 : vector<1x128x128xbf16> to vector<128x128xbf16>
    %cst = arith.constant dense<0.000000e+00> : vector<64x128xf32>
    %8 = tpu.matmul %5, %7, %cst {dimension_numbers = #tpu.dot_dimension_numbers<[1], [0], [0], [1], [0, 0, 1, 1], [], []>} : vector<64x128xbf16>, vector<128x128xbf16>, vector<64x128xf32> -> vector<64x128xf32>
    %9 = arith.addf %3, %8 : vector<64x128xf32>
    %c0_8 = arith.constant 0 : index
    %c0_9 = arith.constant 0 : index
    %10 = vector.load %arg9[%c0_8, %c0_9] : memref<64x128xf32, #tpu.memory_space<vmem>>, vector<64x128xf32>
    tpu.vector_store %arg9[%c0_8, %c0_9], %9 {strides = array<i32>} : memref<64x128xf32, #tpu.memory_space<vmem>>, vector<64x128xf32>,
    %c1_i32 = arith.constant 1 : i32
    %11 = arith.cmpi eq, %arg3, %c1_i32 : i32
    %c6_i32 = arith.constant 6 : i32
    %12 = arith.cmpi slt, %arg2, %c6_i32 : i32
    %13 = arith.andi %11, %12 : i1
    %14 = arith.extui %13 : i1 to i32
    %c0_i32_10 = arith.constant 0 : i32
    %15 = arith.cmpi ne, %14, %c0_i32_10 : i32
    scf.if %15 {
      %c0_13 = arith.constant 0 : index
      %c0_14 = arith.constant 0 : index
      %20 = vector.load %arg9[%c0_13, %c0_14] : memref<64x128xf32, #tpu.memory_space<vmem>>, vector<64x128xf32>
      %21 = arith.truncf %20 : vector<64x128xf32> to vector<64x128xbf16>
      %22 = arith.extf %21 : vector<64x128xbf16> to vector<64x128xf32>
      %c0_15 = arith.constant 0 : index
      %c0_16 = arith.constant 0 : index
      %c0_17 = arith.constant 0 : index
      %23 = vector.load %arg6[%c0_15, %c0_16, %c0_17] : memref<1x64x128xf32, #tpu.memory_space<vmem>>, vector<1x64x128xf32>
      %24 = vector.shape_cast %23 : vector<1x64x128xf32> to vector<64x128xf32>
      %25 = arith.mulf %22, %24 : vector<64x128xf32>
      %c64_i32 = arith.constant 64 : i32
      %26 = tpu.dynamic_rotate %22 by %c64_i32 dim 1 : vector<64x128xf32>, i32 -> vector<64x128xf32>
      %c0_18 = arith.constant 0 : index
      %c0_19 = arith.constant 0 : index
      %c0_20 = arith.constant 0 : index
      %27 = vector.load %arg7[%c0_18, %c0_19, %c0_20] : memref<1x64x128xf32, #tpu.memory_space<vmem>>, vector<1x64x128xf32>
      %28 = vector.shape_cast %27 : vector<1x64x128xf32> to vector<64x128xf32>
      %29 = arith.mulf %26, %28 : vector<64x128xf32>
      %30 = arith.addf %25, %29 : vector<64x128xf32>
      %31 = arith.truncf %30 : vector<64x128xf32> to vector<64x128xbf16>
      %c0_21 = arith.constant 0 : index
      %c0_22 = arith.constant 0 : index
      %c0_23 = arith.constant 0 : index
      %c0_24 = arith.constant 0 : index
      %32 = vector.load %arg8[%c0_21, %c0_22, %c0_23, %c0_24] : memref<1x1x64x128xbf16, #tpu.memory_space<vmem>>, vector<1x1x64x128xbf16>
      %33 = vector.shape_cast %32 : vector<1x1x64x128xbf16> to vector<64x128xbf16>
      %34 = vector.shape_cast %31 : vector<64x128xbf16> to vector<1x1x64x128xbf16>
      tpu.vector_store %arg8[%c0_21, %c0_22, %c0_23, %c0_24], %34 {strides = array<i32>} : memref<1x1x64x128xbf16, #tpu.memory_space<vmem>>, vector<1x1x64x128xbf16>,
    } else {
    }
    %c6_i32_11 = arith.constant 6 : i32
    %16 = arith.cmpi sge, %arg2, %c6_i32_11 : i32
    %17 = arith.andi %11, %16 : i1
    %18 = arith.extui %17 : i1 to i32
    %c0_i32_12 = arith.constant 0 : i32
    %19 = arith.cmpi ne, %18, %c0_i32_12 : i32
    scf.if %19 {
      %c0_13 = arith.constant 0 : index
      %c0_14 = arith.constant 0 : index
      %20 = vector.load %arg9[%c0_13, %c0_14] : memref<64x128xf32, #tpu.memory_space<vmem>>, vector<64x128xf32>
      %21 = arith.truncf %20 : vector<64x128xf32> to vector<64x128xbf16>
      %c0_15 = arith.constant 0 : index
      %c0_16 = arith.constant 0 : index
      %c0_17 = arith.constant 0 : index
      %c0_18 = arith.constant 0 : index
      %22 = vector.load %arg8[%c0_15, %c0_16, %c0_17, %c0_18] : memref<1x1x64x128xbf16, #tpu.memory_space<vmem>>, vector<1x1x64x128xbf16>
      %23 = vector.shape_cast %22 : vector<1x1x64x128xbf16> to vector<64x128xbf16>
      %24 = vector.shape_cast %21 : vector<64x128xbf16> to vector<1x1x64x128xbf16>
      tpu.vector_store %arg8[%c0_15, %c0_16, %c0_17, %c0_18], %24 {strides = array<i32>} : memref<1x1x64x128xbf16, #tpu.memory_space<vmem>>, vector<1x1x64x128xbf16>,
    } else {
    }
    return
  }
  func.func @transform_0(%arg0: i32, %arg1: i32, %arg2: i32, %arg3: i32) -> (i32, i32, i32) {
    %c0_i32 = arith.constant 0 : i32
    return %arg0, %arg1, %arg3 : i32, i32, i32
  }
  func.func @transform_1(%arg0: i32, %arg1: i32, %arg2: i32, %arg3: i32) -> (i32, i32, i32) {
    %c0_i32 = arith.constant 0 : i32
    %c0_i32_0 = arith.constant 0 : i32
    return %arg2, %arg3, %c0_i32 : i32, i32, i32
  }
  func.func @transform_2(%arg0: i32, %arg1: i32, %arg2: i32, %arg3: i32) -> (i32, i32, i32) {
    %c0_i32 = arith.constant 0 : i32
    %c0_i32_0 = arith.constant 0 : i32
    return %arg0, %arg1, %c0_i32 : i32, i32, i32
  }
  func.func @transform_3(%arg0: i32, %arg1: i32, %arg2: i32, %arg3: i32) -> (i32, i32, i32) {
    %c0_i32 = arith.constant 0 : i32
    %c0_i32_0 = arith.constant 0 : i32
    return %arg0, %arg1, %c0_i32 : i32, i32, i32
  }
  func.func @transform_4(%arg0: i32, %arg1: i32, %arg2: i32, %arg3: i32) -> (i32, i32, i32, i32) {
    %c0_i32 = arith.constant 0 : i32
    %c0_i32_0 = arith.constant 0 : i32
    return %arg2, %arg0, %arg1, %c0_i32 : i32, i32, i32, i32
  }
}

</mosaic_0001>

<llo_original>
// kernel: tpu_custom_call.1
$region0: #{tpu_custom_call.1}
  #allocation0 [shape = 'u32[]', space=smem, size = 0x4, offset = 0x4, fixed_abs, tag = 'smem constant byte address 0x4 - core index']
  #allocation1 [shape = 'u32[144,128]{1,0:T(1,128)}', space=vmem, size = 0x12000, scoped, tag = 'internal scratch']
  #allocation2 [shape = 'f32[64,128]{1,0:T(8,128)}', space=vmem, size = 0x8000, scoped, tag = 'scratch operand']
  %s0 = inlined_call_operand.hbm [shape: bf16[2,128,256], index: 0, kind: input, shape index: {}]
  %s1 = inlined_call_operand.hbm [shape: bf16[8,256,128], index: 1, kind: input, shape index: {}]
  %s2 = inlined_call_operand.hbm [shape: f32[2,128,128], index: 2, kind: input, shape index: {}]
  %s3 = inlined_call_operand.hbm [shape: f32[2,128,128], index: 3, kind: input, shape index: {}]
  %s4 = inlined_call_operand.hbm [shape: bf16[8,2,128,128], index: 4, kind: output, shape index: {}]
  %s5 = sld [smem:[#allocation0]]
  $region77: #{tpu_custom_call.1} parent=0
    _
  %s7 = ssub.s32 1, %s5
  %s8 = scalar_select 0, %s7, %s5
  $region1: #{tpu_custom_call.1} parent=0
    #allocation3 [shape = 'u8[32768]{0}', space=vmem, size = 0x8000, scoped, tag = 'input window, operand 0']
    #allocation4 [shape = 's32[2]{0}', space=sflag, size = 0x8, scoped, tag = 'scoped memory for tpu_custom_call.1']
    #allocation5 [shape = 's32[2]{0}', space=sflag, size = 0x8, scoped, tag = 'scoped memory for tpu_custom_call.1']
    #allocation6 [shape = 'u8[65536]{0}', space=vmem, size = 0x10000, scoped, tag = 'input window, operand 1']
    #allocation7 [shape = 's32[2]{0}', space=sflag, size = 0x8, scoped, tag = 'scoped memory for tpu_custom_call.1']
    #allocation8 [shape = 'u8[65536]{0}', space=vmem, size = 0x10000, scoped, tag = 'input window, operand 2']
    #allocation9 [shape = 'u8[65536]{0}', space=vmem, size = 0x10000, scoped, tag = 'input window, operand 3']
    #allocation10 [shape = 's32[2]{0}', space=sflag, size = 0x8, scoped, tag = 'scoped memory for tpu_custom_call.1']
    #allocation11 [shape = 'u8[32768]{0}', space=vmem, size = 0x8000, scoped, tag = 'output window, operand 0']
    %9 = vsyncpa [#allocation4], 0
    %s10 = scalar_lea.sflag [#allocation4], 1
    %11 = vsyncpa %s10, 0
    %12 = vsyncpa [#allocation7], 0
    %s13 = scalar_lea.sflag [#allocation7], 1
    %14 = vsyncpa %s13, 0
    %15 = vsyncpa [#allocation10], 0
    %s16 = scalar_lea.sflag [#allocation10], 1
    %17 = vsyncpa %s16, 0
    %18 = vsyncpa [#allocation5], 0
    %s19 = scalar_lea.sflag [#allocation5], 1
    %20 = vsyncpa %s19, 0
    loop: start=0, step=1, limit=66
    $region2: #{tpu_custom_call.1} parent=1 // loop_pre_header
      _
    $region3: #{tpu_custom_call.1} parent=1 // loop_header
      %s22 = sphi 0, %s26
      %p23 = scmp.ge.s32.totalorder %s22, 66
      %s29 = sphi 0, %s55
      %s30 = sphi 0, %s51
      %s31 = sphi 0, %s47
      %s32 = sphi 0, %s43
      %s33 = sphi 0, %s29
      %s34 = sphi 0, %s30
      %s35 = sphi 0, %s31
      %s36 = sphi 0, %s32
      %s37 = sphi 0, %s33
      %s38 = sphi 0, %s34
      %s39 = sphi 0, %s35
      %s40 = sphi 0, %s36
      %s62 = sphi 0, %s64
      %s65 = sphi 0, %s62
      %s66 = sphi 0, %s65
      %s82 = sphi 0, %s66
      %s90 = sphi 0, %s92
      %s93 = sphi 0, %s90
      %s94 = sphi 0, %s93
      %s110 = sphi 0, %s94
      %s118 = sphi 0, %s120
      %s121 = sphi 0, %s118
      %s122 = sphi 0, %s121
      %s138 = sphi 0, %s122
      %s146 = sphi 0, %s148
      %s149 = sphi 0, %s146
      %s150 = sphi 0, %s149
      %s166 = sphi 0, %s150
      %s176 = sphi 0, %s178
      %s179 = sphi 0, %s176
      %s180 = sphi 0, %s179
      %s196 = sphi 0, %s180
    $region4: #{tpu_custom_call.1} parent=1 // loop_header_branch
      %25 = sbr.rel (%p23) target = $region8
    $region5: #{tpu_custom_call.1} parent=1 // loop_body
      %s27 = ssub.s32 %s22, 1
      %s28 = ssub.s32 %s22, 2
      %s41 = sadd.s32 1, %s32
      %p42 = scmp.ge.s32.totalorder %s41, 2
      %s43 = scalar_select %p42, 0, %s41
      %s44 = sadd.s32 1, %s31
      %s45 = scalar_select %p42, %s44, %s31
      %p46 = scmp.ge.s32.totalorder %s45, 8
      %s47 = scalar_select %p46, 0, %s45
      %s48 = sadd.s32 1, %s30
      %s49 = scalar_select %p46, %s48, %s30
      %p50 = scmp.ge.s32.totalorder %s49, 2
      %s51 = scalar_select %p50, 0, %s49
      %s52 = sadd.s32 1, %s29
      %s53 = scalar_select %p50, %s52, %s29
      %p54 = scmp.ge.s32.totalorder %s53, 2
      %s55 = scalar_select %p54, 0, %s53
      %s56 = ssub.s32 %s29, %s55
      %s57 = ssub.s32 %s30, %s51
      %s58 = sor.u32 %s56, %s57
      %s59 = ssub.s32 %s32, %s43
      %s60 = sor.u32 %s58, %s59
      %p61 = scmp.eq.s32.totalorder %s60, 0
      %s63 = sadd.s32 %s62, 1
      %s64 = scalar_select %p61, %s62, %s63
      %p67 = pneg %p61
      %p68 = scmp.eq.s32.totalorder %s22, 63
      %p69 = por %p67, %p68
      %p70 = scmp.ne.s32.totalorder %s62, %s65
      %p71 = scmp.eq.s32.totalorder %s22, 0
      %p72 = por %p70, %p71
      %p73 = scmp.ne.s32.totalorder %s62, %s65
      %p74 = scmp.eq.s32.totalorder %s27, 63
      %p75 = por %p73, %p74
      %p76 = scmp.ne.s32.totalorder %s65, %s66
      %p77 = scmp.eq.s32.totalorder %s27, 0
      %p78 = por %p76, %p77
      %p79 = scmp.ne.s32.totalorder %s65, %s66
      %p80 = scmp.eq.s32.totalorder %s28, 63
      %p81 = por %p79, %p80
      %p83 = scmp.ne.s32.totalorder %s66, %s82
      %p84 = scmp.eq.s32.totalorder %s28, 0
      %p85 = por %p83, %p84
      %s86 = ssub.s32 %s31, %s47
      %s87 = ssub.s32 %s32, %s43
      %s88 = sor.u32 %s86, %s87
      %p89 = scmp.eq.s32.totalorder %s88, 0
      %s91 = sadd.s32 %s90, 1
      %s92 = scalar_select %p89, %s90, %s91
      %p95 = pneg %p89
      %p96 = scmp.eq.s32.totalorder %s22, 63
      %p97 = por %p95, %p96
      %p98 = scmp.ne.s32.totalorder %s90, %s93
      %p99 = scmp.eq.s32.totalorder %s22, 0
      %p100 = por %p98, %p99
      %p101 = scmp.ne.s32.totalorder %s90, %s93
      %p102 = scmp.eq.s32.totalorder %s27, 63
      %p103 = por %p101, %p102
      %p104 = scmp.ne.s32.totalorder %s93, %s94
      %p105 = scmp.eq.s32.totalorder %s27, 0
      %p106 = por %p104, %p105
      %p107 = scmp.ne.s32.totalorder %s93, %s94
      %p108 = scmp.eq.s32.totalorder %s28, 63
      %p109 = por %p107, %p108
      %p111 = scmp.ne.s32.totalorder %s94, %s110
      %p112 = scmp.eq.s32.totalorder %s28, 0
      %p113 = por %p111, %p112
      %s114 = ssub.s32 %s29, %s55
      %s115 = ssub.s32 %s30, %s51
      %s116 = sor.u32 %s114, %s115
      %p117 = scmp.eq.s32.totalorder %s116, 0
      %s119 = sadd.s32 %s118, 1
      %s120 = scalar_select %p117, %s118, %s119
      %p123 = pneg %p117
      %p124 = scmp.eq.s32.totalorder %s22, 63
      %p125 = por %p123, %p124
      %p126 = scmp.ne.s32.totalorder %s118, %s121
      %p127 = scmp.eq.s32.totalorder %s22, 0
      %p128 = por %p126, %p127
      %p129 = scmp.ne.s32.totalorder %s118, %s121
      %p130 = scmp.eq.s32.totalorder %s27, 63
      %p131 = por %p129, %p130
      %p132 = scmp.ne.s32.totalorder %s121, %s122
      %p133 = scmp.eq.s32.totalorder %s27, 0
      %p134 = por %p132, %p133
      %p135 = scmp.ne.s32.totalorder %s121, %s122
      %p136 = scmp.eq.s32.totalorder %s28, 63
      %p137 = por %p135, %p136
      %p139 = scmp.ne.s32.totalorder %s122, %s138
      %p140 = scmp.eq.s32.totalorder %s28, 0
      %p141 = por %p139, %p140
      %s142 = ssub.s32 %s29, %s55
      %s143 = ssub.s32 %s30, %s51
      %s144 = sor.u32 %s142, %s143
      %p145 = scmp.eq.s32.totalorder %s144, 0
      %s147 = sadd.s32 %s146, 1
      %s148 = scalar_select %p145, %s146, %s147
      %p151 = pneg %p145
      %p152 = scmp.eq.s32.totalorder %s22, 63
      %p153 = por %p151, %p152
      %p154 = scmp.ne.s32.totalorder %s146, %s149
      %p155 = scmp.eq.s32.totalorder %s22, 0
      %p156 = por %p154, %p155
      %p157 = scmp.ne.s32.totalorder %s146, %s149
      %p158 = scmp.eq.s32.totalorder %s27, 63
      %p159 = por %p157, %p158
      %p160 = scmp.ne.s32.totalorder %s149, %s150
      %p161 = scmp.eq.s32.totalorder %s27, 0
      %p162 = por %p160, %p161
      %p163 = scmp.ne.s32.totalorder %s149, %s150
      %p164 = scmp.eq.s32.totalorder %s28, 63
      %p165 = por %p163, %p164
      %p167 = scmp.ne.s32.totalorder %s150, %s166
      %p168 = scmp.eq.s32.totalorder %s28, 0
      %p169 = por %p167, %p168
      %s170 = ssub.s32 %s31, %s47
      %s171 = ssub.s32 %s29, %s55
      %s172 = sor.u32 %s170, %s171
      %s173 = ssub.s32 %s30, %s51
      %s174 = sor.u32 %s172, %s173
      %p175 = scmp.eq.s32.totalorder %s174, 0
      %s177 = sadd.s32 %s176, 1
      %s178 = scalar_select %p175, %s176, %s177
      %p181 = pneg %p175
      %p182 = scmp.eq.s32.totalorder %s22, 63
      %p183 = por %p181, %p182
      %p184 = scmp.ne.s32.totalorder %s176, %s179
      %p185 = scmp.eq.s32.totalorder %s22, 0
      %p186 = por %p184, %p185
      %p187 = scmp.ne.s32.totalorder %s176, %s179
      %p188 = scmp.eq.s32.totalorder %s27, 63
      %p189 = por %p187, %p188
      %p190 = scmp.ne.s32.totalorder %s179, %s180
      %p191 = scmp.eq.s32.totalorder %s27, 0
      %p192 = por %p190, %p191
      %p193 = scmp.ne.s32.totalorder %s179, %s180
      %p194 = scmp.eq.s32.totalorder %s28, 63
      %p195 = por %p193, %p194
      %p197 = scmp.ne.s32.totalorder %s180, %s196
      %p198 = scmp.eq.s32.totalorder %s28, 0
      %p199 = por %p197, %p198
      %p200 = scmp.le.s32.totalorder 1, %s22
      %p201 = scmp.lt.s32.totalorder %s22, 65
      %p202 = pnand %p200, %p201
      %p203 = pneg %p202
      // Predicated region
      $region9: #{tpu_custom_call.1} parent=5 // pred_check
        _
      $region10: #{tpu_custom_call.1} parent=5 // pred_check_branch
        %205 = sbr.rel (%p202) target = $region12
      $region11: #{tpu_custom_call.1} parent=5 // pred_region
        %s206 = ssub.s32 %s22, 1
      $region12: #{tpu_custom_call.1} parent=5 // pred_fallthru
        _
      %p207 = scmp.lt.s32.totalorder %s22, 64
      // Predicated region
      $region13: #{tpu_custom_call.1} parent=5 // pred_check
        %p208 = pneg %p207
      $region14: #{tpu_custom_call.1} parent=5 // pred_check_branch
        %210 = sbr.rel (%p208) target = $region16
      $region15: #{tpu_custom_call.1} parent=5 // pred_region
        // Predicated region
        $region17: #{tpu_custom_call.1} parent=15 // pred_check
          %p211 = pneg %p72
        $region18: #{tpu_custom_call.1} parent=15 // pred_check_branch
          %213 = sbr.rel (%p211) target = $region20
        $region19: #{tpu_custom_call.1} parent=15 // pred_region
          %s214 = sand.u32 %s62, 1
          %s215 = scalar_lea.sflag [#allocation4], %s214
          %s216 = sand.u32 %s62, 1
          %s217 = smul.addr %s216, 32
          %s218 = scalar_lea.vmem [#allocation3], %s217
          %s219 = smul.u32 8, %s30
          %s221 = ssub.s32 512, 512
          %222 = vsyncadd %s215, %s221
          %s223 = smul.addr %s219, 2
          %s224 = sadd.s32 %s32, %s223
          %s225 = smul.addr %s29, 32
          %s226 = sadd.s32 %s224, %s225
          %s227 = smul.addr %s226, 64
          %s228 = scalar_lea.hbm %s0, %s227
          %s229 = sshll.u32 %s218, 4
          %s230 = int_to_ptr.vmem [resolvable:$true] %s229
          %235 = dma.hbm_to_vmem [thread:$0]  %s228, 512, %s230, %s215, 128, 64, 4
        $region20: #{tpu_custom_call.1} parent=15 // pred_fallthru
          _
        // Predicated region
        $region21: #{tpu_custom_call.1} parent=15 // pred_check
          %p236 = pneg %p100
        $region22: #{tpu_custom_call.1} parent=15 // pred_check_branch
          %238 = sbr.rel (%p236) target = $region24
        $region23: #{tpu_custom_call.1} parent=15 // pred_region
          %s239 = sand.u32 %s22, 1
          %s240 = scalar_lea.sflag [#allocation7], %s239
          %s241 = sand.u32 %s90, 1
          %s242 = smul.addr %s241, 64
          %s243 = scalar_lea.vmem [#allocation6], %s242
          %s244 = smul.u32 16, %s32
          %s246 = ssub.s32 1024, 1024
          %247 = vsyncadd %s240, %s246
          %s248 = smul.addr %s31, 32
          %s249 = sadd.s32 %s244, %s248
          %s250 = smul.addr %s249, 64
          %s251 = scalar_lea.hbm %s1, %s250
          %s252 = sshll.u32 %s243, 4
          %s253 = int_to_ptr.vmem [resolvable:$true] %s252
          %258 = dma.hbm_to_vmem [thread:$0]  %s251, 1024, %s253, %s240, 64, 64, 4
        $region24: #{tpu_custom_call.1} parent=15 // pred_fallthru
          _
        // Predicated region
        $region25: #{tpu_custom_call.1} parent=15 // pred_check
          %p259 = pneg %p128
        $region26: #{tpu_custom_call.1} parent=15 // pred_check_branch
          %261 = sbr.rel (%p259) target = $region28
        $region27: #{tpu_custom_call.1} parent=15 // pred_region
          %s262 = sand.u32 %s22, 1
          %s263 = scalar_lea.sflag [#allocation7], %s262
          %s264 = sand.u32 %s118, 1
          %s265 = smul.addr %s264, 64
          %s266 = scalar_lea.vmem [#allocation8], %s265
          %s267 = smul.u32 8, %s30
          %s269 = ssub.s32 1024, 1024
          %270 = vsyncadd %s263, %s269
          %s271 = smul.addr %s29, 16
          %s272 = sadd.s32 %s267, %s271
          %s273 = smul.addr %s272, 128
          %s274 = scalar_lea.hbm %s2, %s273
          %s275 = sshll.u32 %s266, 4
          %s276 = int_to_ptr.vmem [resolvable:$true] %s275
          %281 = dma.hbm_to_vmem [thread:$0]  %s274, 1024, %s276, %s263, 128, 128, 8
        $region28: #{tpu_custom_call.1} parent=15 // pred_fallthru
          _
        // Predicated region
        $region29: #{tpu_custom_call.1} parent=15 // pred_check
          %p282 = pneg %p156
        $region30: #{tpu_custom_call.1} parent=15 // pred_check_branch
          %284 = sbr.rel (%p282) target = $region32
        $region31: #{tpu_custom_call.1} parent=15 // pred_region
          %s285 = sand.u32 %s146, 1
          %s286 = scalar_lea.sflag [#allocation10], %s285
          %s287 = sand.u32 %s146, 1
          %s288 = smul.addr %s287, 64
          %s289 = scalar_lea.vmem [#allocation9], %s288
          %s290 = smul.u32 8, %s30
          %s292 = ssub.s32 1024, 1024
          %293 = vsyncadd %s286, %s292
          %s294 = smul.addr %s29, 16
          %s295 = sadd.s32 %s290, %s294
          %s296 = smul.addr %s295, 128
          %s297 = scalar_lea.hbm %s3, %s296
          %s298 = sshll.u32 %s289, 4
          %s299 = int_to_ptr.vmem [resolvable:$true] %s298
          %304 = dma.hbm_to_vmem [thread:$0]  %s297, 1024, %s299, %s286, 128, 128, 8
        $region32: #{tpu_custom_call.1} parent=15 // pred_fallthru
          _
      $region16: #{tpu_custom_call.1} parent=5 // pred_fallthru
        _
      %p305 = scmp.le.s32.totalorder 1, %s22
      %p306 = scmp.lt.s32.totalorder %s22, 65
      %p307 = pnand %p305, %p306
      %p308 = pneg %p307
      // Predicated region
      $region33: #{tpu_custom_call.1} parent=5 // pred_check
        _
      $region34: #{tpu_custom_call.1} parent=5 // pred_check_branch
        %310 = sbr.rel (%p307) target = $region36
      $region35: #{tpu_custom_call.1} parent=5 // pred_region
        %s311 = ssub.s32 %s22, 1
        %s312 = sand.u32 %s65, 1
        %s313 = scalar_lea.sflag [#allocation4], %s312
        %s314 = sand.u32 %s65, 1
        %s315 = smul.addr %s314, 32
        %s316 = scalar_lea.vmem [#allocation3], %s315
        // Predicated region
        $region37: #{tpu_custom_call.1} parent=35 // pred_check
          %p317 = pneg %p78
        $region38: #{tpu_custom_call.1} parent=35 // pred_check_branch
          %319 = sbr.rel (%p317) target = $region40
        $region39: #{tpu_custom_call.1} parent=35 // pred_region
          %320 = dma.done %s313, 512
        $region40: #{tpu_custom_call.1} parent=35 // pred_fallthru
          _
        %s321 = sand.u32 %s27, 1
        %s322 = scalar_lea.sflag [#allocation7], %s321
        %s323 = sand.u32 %s93, 1
        %s324 = smul.addr %s323, 64
        %s325 = scalar_lea.vmem [#allocation6], %s324
        // Predicated region
        $region41: #{tpu_custom_call.1} parent=35 // pred_check
          %p326 = pneg %p106
        $region42: #{tpu_custom_call.1} parent=35 // pred_check_branch
          %328 = sbr.rel (%p326) target = $region44
        $region43: #{tpu_custom_call.1} parent=35 // pred_region
          %329 = dma.done %s322, 1024
        $region44: #{tpu_custom_call.1} parent=35 // pred_fallthru
          _
        %s330 = sand.u32 %s27, 1
        %s331 = scalar_lea.sflag [#allocation7], %s330
        %s332 = sand.u32 %s121, 1
        %s333 = smul.addr %s332, 64
        %s334 = scalar_lea.vmem [#allocation8], %s333
        // Predicated region
        $region45: #{tpu_custom_call.1} parent=35 // pred_check
          %p335 = pneg %p134
        $region46: #{tpu_custom_call.1} parent=35 // pred_check_branch
          %337 = sbr.rel (%p335) target = $region48
        $region47: #{tpu_custom_call.1} parent=35 // pred_region
          %338 = dma.done %s331, 1024
        $region48: #{tpu_custom_call.1} parent=35 // pred_fallthru
          _
        %s339 = sand.u32 %s149, 1
        %s340 = scalar_lea.sflag [#allocation10], %s339
        %s341 = sand.u32 %s149, 1
        %s342 = smul.addr %s341, 64
        %s343 = scalar_lea.vmem [#allocation9], %s342
        // Predicated region
        $region49: #{tpu_custom_call.1} parent=35 // pred_check
          %p344 = pneg %p162
        $region50: #{tpu_custom_call.1} parent=35 // pred_check_branch
          %346 = sbr.rel (%p344) target = $region52
        $region51: #{tpu_custom_call.1} parent=35 // pred_region
          %347 = dma.done %s340, 1024
        $region52: #{tpu_custom_call.1} parent=35 // pred_fallthru
          _
        %s348 = sand.u32 %s65, 1
        %s349 = scalar_lea.sflag [#allocation4], %s348
        %s350 = sand.u32 %s65, 1
        %s351 = smul.addr %s350, 32
        %s352 = scalar_lea.vmem [#allocation3], %s351
        %p353 = pneg %p78
        %p354 = pneg %p75
        %s355 = sand.u32 %s27, 1
        %s356 = scalar_lea.sflag [#allocation7], %s355
        %s357 = sand.u32 %s93, 1
        %s358 = smul.addr %s357, 64
        %s359 = scalar_lea.vmem [#allocation6], %s358
        %p360 = pneg %p106
        %p361 = pneg %p103
        %s362 = sand.u32 %s27, 1
        %s363 = scalar_lea.sflag [#allocation7], %s362
        %s364 = sand.u32 %s121, 1
        %s365 = smul.addr %s364, 64
        %s366 = scalar_lea.vmem [#allocation8], %s365
        %p367 = pneg %p134
        %p368 = pneg %p131
        %s369 = sand.u32 %s149, 1
        %s370 = scalar_lea.sflag [#allocation10], %s369
        %s371 = sand.u32 %s149, 1
        %s372 = smul.addr %s371, 64
        %s373 = scalar_lea.vmem [#allocation9], %s372
        %p374 = pneg %p162
        %p375 = pneg %p159
        %p376 = pneg %p192
        %p377 = pneg %p189
        %s378 = sand.u32 %s179, 1
        %s379 = scalar_lea.sflag [#allocation5], %s378
        %s380 = sand.u32 %s179, 1
        %s381 = smul.addr %s380, 32
        %s382 = scalar_lea.vmem [#allocation11], %s381
        %s383 = smul.u32 8, %s34
        %s384 = smul.u32 16, %s36
        %s385 = smul.u32 8, %s34
        %s386 = smul.u32 8, %s34
        %s387 = smul.u32 8, %s34
        %p389 = scmp.eq.s32.totalorder %s36, 0
        // Predicated region
        $region53: #{tpu_custom_call.1} parent=35 // pred_check
          %p390 = pneg %p389
        $region54: #{tpu_custom_call.1} parent=35 // pred_check_branch
          %392 = sbr.rel (%p390) target = $region56
        $region55: #{tpu_custom_call.1} parent=35 // pred_region
          %393 = vst [vmem:[#allocation2] sm:$0xff] 0.0
          %394 = vst [vmem:[#allocation2 + $0x8] sm:$0xff] 0.0
          %395 = vst [vmem:[#allocation2 + $0x10] sm:$0xff] 0.0
          %396 = vst [vmem:[#allocation2 + $0x18] sm:$0xff] 0.0
          %397 = vst [vmem:[#allocation2 + $0x20] sm:$0xff] 0.0
          %398 = vst [vmem:[#allocation2 + $0x28] sm:$0xff] 0.0
          %399 = vst [vmem:[#allocation2 + $0x30] sm:$0xff] 0.0
          %400 = vst [vmem:[#allocation2 + $0x38] sm:$0xff] 0.0
        $region56: #{tpu_custom_call.1} parent=35 // pred_fallthru
          _
        %v401 = vld [vmem:[#allocation2] sm:$0xff]
        %v402 = vld [vmem:[#allocation2 + $0x8] sm:$0xff]
        %v403 = vld [vmem:[#allocation2 + $0x10] sm:$0xff]
        %v404 = vld [vmem:[#allocation2 + $0x18] sm:$0xff]
        %v405 = vld [vmem:[#allocation2 + $0x20] sm:$0xff]
        %v406 = vld [vmem:[#allocation2 + $0x28] sm:$0xff]
        %v407 = vld [vmem:[#allocation2 + $0x30] sm:$0xff]
        %v408 = vld [vmem:[#allocation2 + $0x38] sm:$0xff]
        %v409 = vld [vmem:[%s316] sm:$0xf]
        %v410 = vld [vmem:[%s316 + $0x4] sm:$0xf]
        %v411 = vld [vmem:[%s316 + $0x8] sm:$0xf]
        %v412 = vld [vmem:[%s316 + $0xc] sm:$0xf]
        %v413 = vld [vmem:[%s316 + $0x10] sm:$0xf]
        %v414 = vld [vmem:[%s316 + $0x14] sm:$0xf]
        %v415 = vld [vmem:[%s316 + $0x18] sm:$0xf]
        %v416 = vld [vmem:[%s316 + $0x1c] sm:$0xf]
        %v417 = vld [vmem:[%s325] sm:$0xf]
        %v418 = vld [vmem:[%s325 + $0x4] sm:$0xf]
        %v419 = vld [vmem:[%s325 + $0x8] sm:$0xf]
        %v420 = vld [vmem:[%s325 + $0xc] sm:$0xf]
        %v421 = vld [vmem:[%s325 + $0x10] sm:$0xf]
        %v422 = vld [vmem:[%s325 + $0x14] sm:$0xf]
        %v423 = vld [vmem:[%s325 + $0x18] sm:$0xf]
        %v424 = vld [vmem:[%s325 + $0x1c] sm:$0xf]
        %v425 = vld [vmem:[%s325 + $0x20] sm:$0xf]
        %v426 = vld [vmem:[%s325 + $0x24] sm:$0xf]
        %v427 = vld [vmem:[%s325 + $0x28] sm:$0xf]
        %v428 = vld [vmem:[%s325 + $0x2c] sm:$0xf]
        %v429 = vld [vmem:[%s325 + $0x30] sm:$0xf]
        %v430 = vld [vmem:[%s325 + $0x34] sm:$0xf]
        %v431 = vld [vmem:[%s325 + $0x38] sm:$0xf]
        %v432 = vld [vmem:[%s325 + $0x3c] sm:$0xf]
        %v441 = vunpack.c.l.b16 %v409
        %v442 = vunpack.c.l.b16 %v410
        %v443 = vunpack.c.l.b16 %v411
        %v444 = vunpack.c.l.b16 %v412
        %v445 = vunpack.c.l.b16 %v413
        %v446 = vunpack.c.l.b16 %v414
        %v447 = vunpack.c.l.b16 %v415
        %v448 = vunpack.c.l.b16 %v416
        %v449 = vpack.c.b16 %v442, %v441
        %v450 = vpack.c.b16 %v444, %v443
        %v451 = vpack.c.b16 %v446, %v445
        %v452 = vpack.c.b16 %v448, %v447
        %v473 = vunpack.c.l.b16 %v417
        %v474 = vunpack.c.l.b16 %v418
        %v475 = vunpack.c.l.b16 %v419
        %v476 = vunpack.c.l.b16 %v420
        %v477 = vunpack.c.l.b16 %v421
        %v478 = vunpack.c.l.b16 %v422
        %v479 = vunpack.c.l.b16 %v423
        %v480 = vunpack.c.l.b16 %v424
        %v481 = vunpack.c.l.b16 %v425
        %v482 = vunpack.c.l.b16 %v426
        %v483 = vunpack.c.l.b16 %v427
        %v484 = vunpack.c.l.b16 %v428
        %v485 = vunpack.c.l.b16 %v429
        %v486 = vunpack.c.l.b16 %v430
        %v487 = vunpack.c.l.b16 %v431
        %v488 = vunpack.c.l.b16 %v432
        %v489 = vpack.c.b16 %v474, %v473
        %v490 = vpack.c.b16 %v476, %v475
        %v491 = vpack.c.b16 %v478, %v477
        %v492 = vpack.c.b16 %v480, %v479
        %v493 = vpack.c.b16 %v482, %v481
        %v494 = vpack.c.b16 %v484, %v483
        %v495 = vpack.c.b16 %v486, %v485
        %v496 = vpack.c.b16 %v488, %v487
        %505 = vmatprep.subr.bf16.mxu0 0
        %506 = vmatpush1.bf16.msra.mxu0 %v496
        %507 = vmatprep.subr.bf16.mxu0 0
        %508 = vmatpush1.bf16.msra.mxu0 %v495
        %509 = vmatprep.subr.bf16.mxu0 0
        %510 = vmatpush1.bf16.msra.mxu0 %v494
        %511 = vmatprep.subr.bf16.mxu0 0
        %512 = vmatpush1.bf16.msra.mxu0 %v493
        %513 = vmatprep.subr.bf16.mxu0 0
        %514 = vmatpush1.bf16.msra.mxu0 %v492
        %515 = vmatprep.subr.bf16.mxu0 0
        %516 = vmatpush1.bf16.msra.mxu0 %v491
        %517 = vmatprep.subr.bf16.mxu0 0
        %518 = vmatpush1.bf16.msra.mxu0 %v490
        %519 = vmatprep.subr.bf16.mxu0 0
        %520 = vmatpush1.bf16.msra.mxu0 %v489
        %521 = vmatprep.subr.bf16.mxu0 0
        %522 = vmatpush2.bf16.msra.mxu0 0
        %523 = vmatprep.subr.bf16.mxu0 0
        %524 = vmatpush2.bf16.msra.mxu0 0
        %525 = vmatprep.subr.bf16.mxu0 0
        %526 = vmatpush2.bf16.msra.mxu0 0
        %527 = vmatprep.subr.bf16.mxu0 0
        %528 = vmatpush2.bf16.msra.mxu0 0
        %529 = vmatprep.subr.bf16.mxu0 0
        %530 = vmatpush2.bf16.msra.mxu0 0
        %531 = vmatprep.subr.bf16.mxu0 0
        %532 = vmatpush2.bf16.msra.mxu0 0
        %533 = vmatprep.subr.bf16.mxu0 0
        %534 = vmatpush2.bf16.msra.mxu0 0
        %535 = vmatprep.subr.bf16.mxu0 0
        %536 = vmatpush2.bf16.msra.mxu0 0
        %537 = vmatprep.mubr.bf16.mxu0 0
        %538 = vmatmul.mubr.bf16.gmra.mxu0 %v449
        %v539 = vpop.f32.mrf.mxu0
        %v540 = vadd.f32 0.0, %v539
        %v541 = vpop.f32.mrf.mxu0
        %v542 = vpop.f32.mrf.mxu0
        %v543 = vadd.f32 0.0, %v542
        %v544 = vpop.f32.mrf.mxu0
        %545 = vmatprep.mubr.bf16.mxu0 0
        %546 = vmatmul.mubr.bf16.gmra.mxu0 %v450
        %v547 = vpop.f32.mrf.mxu0
        %v548 = vadd.f32 0.0, %v547
        %v549 = vpop.f32.mrf.mxu0
        %v550 = vpop.f32.mrf.mxu0
        %v551 = vadd.f32 0.0, %v550
        %v552 = vpop.f32.mrf.mxu0
        %553 = vmatprep.mubr.bf16.mxu0 0
        %554 = vmatmul.mubr.bf16.gmra.mxu0 %v451
        %v555 = vpop.f32.mrf.mxu0
        %v556 = vadd.f32 0.0, %v555
        %v557 = vpop.f32.mrf.mxu0
        %v558 = vpop.f32.mrf.mxu0
        %v559 = vadd.f32 0.0, %v558
        %v560 = vpop.f32.mrf.mxu0
        %561 = vmatprep.mubr.bf16.mxu0 0
        %562 = vmatmul.mubr.bf16.gmra.mxu0 %v452
        %v563 = vpop.f32.mrf.mxu0
        %v564 = vadd.f32 0.0, %v563
        %v565 = vpop.f32.mrf.mxu0
        %v566 = vpop.f32.mrf.mxu0
        %v567 = vadd.f32 0.0, %v566
        %v568 = vpop.f32.mrf.mxu0
        %569 = vdwg.mxu0
        %v570 = vadd.f32 %v401, %v540
        %v571 = vadd.f32 %v402, %v543
        %v572 = vadd.f32 %v403, %v548
        %v573 = vadd.f32 %v404, %v551
        %v574 = vadd.f32 %v405, %v556
        %v575 = vadd.f32 %v406, %v559
        %v576 = vadd.f32 %v407, %v564
        %v577 = vadd.f32 %v408, %v567
        %578 = vst [vmem:[#allocation2] sm:$0xff] %v570
        %579 = vst [vmem:[#allocation2 + $0x8] sm:$0xff] %v571
        %580 = vst [vmem:[#allocation2 + $0x10] sm:$0xff] %v572
        %581 = vst [vmem:[#allocation2 + $0x18] sm:$0xff] %v573
        %582 = vst [vmem:[#allocation2 + $0x20] sm:$0xff] %v574
        %583 = vst [vmem:[#allocation2 + $0x28] sm:$0xff] %v575
        %584 = vst [vmem:[#allocation2 + $0x30] sm:$0xff] %v576
        %585 = vst [vmem:[#allocation2 + $0x38] sm:$0xff] %v577
        %p586 = scmp.eq.s32.totalorder %s36, 1
        %p587 = scmp.lt.s32.totalorder %s35, 6
        %p588 = pnand %p586, %p587
        %p589 = pneg %p588
        // Predicated region
        $region57: #{tpu_custom_call.1} parent=35 // pred_check
          _
        $region58: #{tpu_custom_call.1} parent=35 // pred_check_branch
          %591 = sbr.rel (%p588) target = $region60
        $region59: #{tpu_custom_call.1} parent=35 // pred_region
          %v592 = vld [vmem:[#allocation2] sm:$0xff]
          %v593 = vld [vmem:[#allocation2 + $0x8] sm:$0xff]
          %v594 = vld [vmem:[#allocation2 + $0x10] sm:$0xff]
          %v595 = vld [vmem:[#allocation2 + $0x18] sm:$0xff]
          %v596 = vld [vmem:[#allocation2 + $0x20] sm:$0xff]
          %v597 = vld [vmem:[#allocation2 + $0x28] sm:$0xff]
          %v598 = vld [vmem:[#allocation2 + $0x30] sm:$0xff]
          %v599 = vld [vmem:[#allocation2 + $0x38] sm:$0xff]
          %v600 = vpack.c.bf16 %v593, %v592
          %v601 = vpack.c.bf16 %v595, %v594
          %v602 = vpack.c.bf16 %v597, %v596
          %v603 = vpack.c.bf16 %v599, %v598
          %v604 = vunpack.c.l.bf16 %v600
          %v605 = vunpack.c.h.bf16 %v600
          %v606 = vunpack.c.l.bf16 %v601
          %v607 = vunpack.c.h.bf16 %v601
          %v608 = vunpack.c.l.bf16 %v602
          %v609 = vunpack.c.h.bf16 %v602
          %v610 = vunpack.c.l.bf16 %v603
          %v611 = vunpack.c.h.bf16 %v603
          %v612 = vld [vmem:[%s334] sm:$0xff]
          %v613 = vld [vmem:[%s334 + $0x8] sm:$0xff]
          %v614 = vld [vmem:[%s334 + $0x10] sm:$0xff]
          %v615 = vld [vmem:[%s334 + $0x18] sm:$0xff]
          %v616 = vld [vmem:[%s334 + $0x20] sm:$0xff]
          %v617 = vld [vmem:[%s334 + $0x28] sm:$0xff]
          %v618 = vld [vmem:[%s334 + $0x30] sm:$0xff]
          %v619 = vld [vmem:[%s334 + $0x38] sm:$0xff]
          %v620 = vmul.f32 %v604, %v612
          %v621 = vmul.f32 %v605, %v613
          %v622 = vmul.f32 %v606, %v614
          %v623 = vmul.f32 %v607, %v615
          %v624 = vmul.f32 %v608, %v616
          %v625 = vmul.f32 %v609, %v617
          %v626 = vmul.f32 %v610, %v618
          %v627 = vmul.f32 %v611, %v619
          %628 = vrot.lane.b32.xlu0 %v604, 64
          %v629 = vpop.permute.xlu0 %628
          %630 = vrot.lane.b32.xlu0 %v605, 64
          %v631 = vpop.permute.xlu0 %630
          %632 = vrot.lane.b32.xlu0 %v606, 64
          %v633 = vpop.permute.xlu0 %632
          %634 = vrot.lane.b32.xlu0 %v607, 64
          %v635 = vpop.permute.xlu0 %634
          %636 = vrot.lane.b32.xlu0 %v608, 64
          %v637 = vpop.permute.xlu0 %636
          %638 = vrot.lane.b32.xlu0 %v609, 64
          %v639 = vpop.permute.xlu0 %638
          %640 = vrot.lane.b32.xlu0 %v610, 64
          %v641 = vpop.permute.xlu0 %640
          %642 = vrot.lane.b32.xlu0 %v611, 64
          %v643 = vpop.permute.xlu0 %642
          %v644 = vld [vmem:[%s343] sm:$0xff]
          %v645 = vld [vmem:[%s343 + $0x8] sm:$0xff]
          %v646 = vld [vmem:[%s343 + $0x10] sm:$0xff]
          %v647 = vld [vmem:[%s343 + $0x18] sm:$0xff]
          %v648 = vld [vmem:[%s343 + $0x20] sm:$0xff]
          %v649 = vld [vmem:[%s343 + $0x28] sm:$0xff]
          %v650 = vld [vmem:[%s343 + $0x30] sm:$0xff]
          %v651 = vld [vmem:[%s343 + $0x38] sm:$0xff]
          %v652 = vmul.f32 %v629, %v644
          %v653 = vmul.f32 %v631, %v645
          %v654 = vmul.f32 %v633, %v646
          %v655 = vmul.f32 %v635, %v647
          %v656 = vmul.f32 %v637, %v648
          %v657 = vmul.f32 %v639, %v649
          %v658 = vmul.f32 %v641, %v650
          %v659 = vmul.f32 %v643, %v651
          %v660 = vadd.f32 %v620, %v652
          %v661 = vadd.f32 %v621, %v653
          %v662 = vadd.f32 %v622, %v654
          %v663 = vadd.f32 %v623, %v655
          %v664 = vadd.f32 %v624, %v656
          %v665 = vadd.f32 %v625, %v657
          %v666 = vadd.f32 %v626, %v658
          %v667 = vadd.f32 %v627, %v659
          %v668 = vpack.c.bf16 %v661, %v660
          %v669 = vpack.c.bf16 %v663, %v662
          %v670 = vpack.c.bf16 %v665, %v664
          %v671 = vpack.c.bf16 %v667, %v666
          %v676 = vunpack.c.l.b16 %v668
          %v677 = vunpack.c.h.b16 %v668
          %v678 = vunpack.c.l.b16 %v669
          %v679 = vunpack.c.h.b16 %v669
          %v680 = vunpack.c.l.b16 %v670
          %v681 = vunpack.c.h.b16 %v670
          %v682 = vunpack.c.l.b16 %v671
          %v683 = vunpack.c.h.b16 %v671
          %v684 = vpack.c.b16 %v676, %v676
          %v685 = vpack.c.b16 %v677, %v677
          %v686 = vpack.c.b16 %v678, %v678
          %v687 = vpack.c.b16 %v679, %v679
          %v688 = vpack.c.b16 %v680, %v680
          %v689 = vpack.c.b16 %v681, %v681
          %v690 = vpack.c.b16 %v682, %v682
          %v691 = vpack.c.b16 %v683, %v683
          %700 = vst [vmem:[%s382] sm:$0xf] %v684
          %701 = vst [vmem:[%s382 + $0x4] sm:$0xf] %v685
          %702 = vst [vmem:[%s382 + $0x8] sm:$0xf] %v686
          %703 = vst [vmem:[%s382 + $0xc] sm:$0xf] %v687
          %704 = vst [vmem:[%s382 + $0x10] sm:$0xf] %v688
          %705 = vst [vmem:[%s382 + $0x14] sm:$0xf] %v689
          %706 = vst [vmem:[%s382 + $0x18] sm:$0xf] %v690
          %707 = vst [vmem:[%s382 + $0x1c] sm:$0xf] %v691
        $region60: #{tpu_custom_call.1} parent=35 // pred_fallthru
          _
        %p708 = scmp.ge.s32.totalorder %s35, 6
        %p709 = pnand %p586, %p708
        %p710 = pneg %p709
        // Predicated region
        $region61: #{tpu_custom_call.1} parent=35 // pred_check
          _
        $region62: #{tpu_custom_call.1} parent=35 // pred_check_branch
          %712 = sbr.rel (%p709) target = $region64
        $region63: #{tpu_custom_call.1} parent=35 // pred_region
          %v713 = vld [vmem:[#allocation2] sm:$0xff]
          %v714 = vld [vmem:[#allocation2 + $0x8] sm:$0xff]
          %v715 = vld [vmem:[#allocation2 + $0x10] sm:$0xff]
          %v716 = vld [vmem:[#allocation2 + $0x18] sm:$0xff]
          %v717 = vld [vmem:[#allocation2 + $0x20] sm:$0xff]
          %v718 = vld [vmem:[#allocation2 + $0x28] sm:$0xff]
          %v719 = vld [vmem:[#allocation2 + $0x30] sm:$0xff]
          %v720 = vld [vmem:[#allocation2 + $0x38] sm:$0xff]
          %v721 = vpack.c.bf16 %v714, %v713
          %v722 = vpack.c.bf16 %v716, %v715
          %v723 = vpack.c.bf16 %v718, %v717
          %v724 = vpack.c.bf16 %v720, %v719
          %v729 = vunpack.c.l.b16 %v721
          %v730 = vunpack.c.h.b16 %v721
          %v731 = vunpack.c.l.b16 %v722
          %v732 = vunpack.c.h.b16 %v722
          %v733 = vunpack.c.l.b16 %v723
          %v734 = vunpack.c.h.b16 %v723
          %v735 = vunpack.c.l.b16 %v724
          %v736 = vunpack.c.h.b16 %v724
          %v737 = vpack.c.b16 %v729, %v729
          %v738 = vpack.c.b16 %v730, %v730
          %v739 = vpack.c.b16 %v731, %v731
          %v740 = vpack.c.b16 %v732, %v732
          %v741 = vpack.c.b16 %v733, %v733
          %v742 = vpack.c.b16 %v734, %v734
          %v743 = vpack.c.b16 %v735, %v735
          %v744 = vpack.c.b16 %v736, %v736
          %753 = vst [vmem:[%s382] sm:$0xf] %v737
          %754 = vst [vmem:[%s382 + $0x4] sm:$0xf] %v738
          %755 = vst [vmem:[%s382 + $0x8] sm:$0xf] %v739
          %756 = vst [vmem:[%s382 + $0xc] sm:$0xf] %v740
          %757 = vst [vmem:[%s382 + $0x10] sm:$0xf] %v741
          %758 = vst [vmem:[%s382 + $0x14] sm:$0xf] %v742
          %759 = vst [vmem:[%s382 + $0x18] sm:$0xf] %v743
          %760 = vst [vmem:[%s382 + $0x1c] sm:$0xf] %v744
        $region64: #{tpu_custom_call.1} parent=35 // pred_fallthru
          _
        %s761 = sand.u32 %s179, 1
        %s762 = scalar_lea.sflag [#allocation5], %s761
        %s763 = sand.u32 %s179, 1
        %s764 = smul.addr %s763, 32
        %s765 = scalar_lea.vmem [#allocation11], %s764
        // Predicated region
        $region65: #{tpu_custom_call.1} parent=35 // pred_check
          %p766 = pneg %p189
        $region66: #{tpu_custom_call.1} parent=35 // pred_check_branch
          %768 = sbr.rel (%p766) target = $region68
        $region67: #{tpu_custom_call.1} parent=35 // pred_region
          %s769 = smul.u32 8, %s34
          %s771 = ssub.s32 512, 512
          %772 = vsyncadd %s762, %s771
          %s773 = smul.addr %s33, 16
          %s774 = sadd.s32 %s769, %s773
          %s775 = smul.addr %s35, 32
          %s776 = sadd.s32 %s774, %s775
          %s777 = smul.addr %s776, 64
          %s778 = scalar_lea.hbm %s4, %s777
          %s779 = sshll.u32 %s765, 4
          %s780 = int_to_ptr.vmem [resolvable:$true] %s779
          %785 = dma.vmem_to_hbm [thread:$0]  %s780, 512, %s778, %s762, 64, 64, 4
        $region68: #{tpu_custom_call.1} parent=35 // pred_fallthru
          _
      $region36: #{tpu_custom_call.1} parent=5 // pred_fallthru
        _
      %p786 = scmp.le.s32.totalorder 2, %s22
      // Predicated region
      $region69: #{tpu_custom_call.1} parent=5 // pred_check
        %p787 = pneg %p786
      $region70: #{tpu_custom_call.1} parent=5 // pred_check_branch
        %789 = sbr.rel (%p787) target = $region72
      $region71: #{tpu_custom_call.1} parent=5 // pred_region
        %s790 = ssub.s32 %s22, 2
        // Predicated region
        $region73: #{tpu_custom_call.1} parent=71 // pred_check
          %p791 = pneg %p195
        $region74: #{tpu_custom_call.1} parent=71 // pred_check_branch
          %793 = sbr.rel (%p791) target = $region76
        $region75: #{tpu_custom_call.1} parent=71 // pred_region
          %s794 = sand.u32 %s180, 1
          %s795 = scalar_lea.sflag [#allocation5], %s794
          %s796 = sand.u32 %s180, 1
          %s797 = smul.addr %s796, 32
          %s798 = scalar_lea.vmem [#allocation11], %s797
          %799 = dma.done %s795, 512
        $region76: #{tpu_custom_call.1} parent=71 // pred_fallthru
          _
      $region72: #{tpu_custom_call.1} parent=5 // pred_fallthru
        _
    $region6: #{tpu_custom_call.1} parent=1 // loop_footer
      %s26 = sadd.s32 1, %s22
    $region7: #{tpu_custom_call.1} parent=1 // loop_footer_branch
      %21 = sbr.rel target = $region3
    $region8: #{tpu_custom_call.1} parent=1 // loop_exit
      _
    %800 = vsyncpa [#allocation4], 1
    %s801 = scalar_lea.sflag [#allocation4], 1
    %802 = vsyncpa %s801, 1
    %803 = vsyncpa [#allocation7], 1
    %s804 = scalar_lea.sflag [#allocation7], 1
    %805 = vsyncpa %s804, 1
    %806 = vsyncpa [#allocation10], 1
    %s807 = scalar_lea.sflag [#allocation10], 1
    %808 = vsyncpa %s807, 1
    %809 = vsyncpa [#allocation5], 1
    %s810 = scalar_lea.sflag [#allocation5], 1
    %811 = vsyncpa %s810, 1

</llo_original>
